<compile_context>
chip_gen: v7x
topology: tpu7x:2x2x1
jax: 0.10.0
libtpu: 0.0.40
codegen_flags: <defaults>
</compile_context>

<pallas_src>
import functools

import jax
import jax.numpy as jnp
from jax.experimental import pallas as pl
from jax.experimental.pallas import tpu as pltpu

LANE = 128


def _round_up(x, m):
    return ((x + m - 1) // m) * m


def _vmem_limit_bytes():
    """~85% of physical VMEM (128 MiB on v5e/v6e, 64 MiB on v7x)."""
    try:
        cap = getattr(pltpu.get_tpu_info(), "vmem_capacity_bytes", None)
    except Exception:
        cap = None
    return int((cap or (64 * 1024 * 1024)) * 0.85)


# ---------------------------------------------------------------------------
# Fused Pallas kernel: all GCN layers + output Linear in a single pallas_call.
# ---------------------------------------------------------------------------

def _fused_gcn_kernel(a_ref, x_ref, w_ref, b_ref, o_ref, xbuf, *, tm):
    """Grid = (n_layers + 1, n_row_tiles); layer axis is outer (sequential).

    a_ref : (tm, Np)     bf16  row tile of the normalized adjacency
    x_ref : (Np, FP)     bf16  padded input node features (resident, fetched once)
    w_ref : (1, FP, FP)  bf16  current step's padded weight (last step = nn.Linear)
    b_ref : (1, 1, FP)   f32   current step's padded bias
    o_ref : (tm, FP)     f32   row tile of the padded logits
    xbuf  : (2, Np, FP)  bf16  ping-pong VMEM-resident node features (scratch)
    """
    l = pl.program_id(0)
    i = pl.program_id(1)
    n_gcn = pl.num_programs(0) - 1          # last step along axis 0 = nn.Linear
    row = pl.multiple_of(i * tm, tm)

    src = l % 2                             # features entering this layer
    dst = (l + 1) % 2                       # features produced by this layer
    x_src = xbuf.at[src]
    x_dst = xbuf.at[dst]

    # One-time init: copy the input features into ping-pong slot 0.
    @pl.when(jnp.logical_and(l == 0, i == 0))
    def _init():
        xbuf[0] = x_ref[...]

    w = w_ref[0]            # (FP, FP) bf16
    b = b_ref[0]            # (1, FP)  f32

    @pl.when(l < n_gcn)
    def _gcn_layer():
        # Reassociated (A_rows @ X) @ W; both matmuls accumulate in f32 on MXU.
        ax = jnp.dot(a_ref[...], x_src[...],
                     preferred_element_type=jnp.float32)
        h = jnp.dot(ax.astype(jnp.bfloat16), w,
                    preferred_element_type=jnp.float32)
        h = jnp.maximum(h + b, 0.0)

        @pl.when(l == 0)
        def _store_no_res():
            x_dst[pl.ds(row, tm), :] = h.astype(jnp.bfloat16)

        @pl.when(l > 0)
        def _store_with_res():
            hr = h + x_src[pl.ds(row, tm), :].astype(jnp.float32)
            x_dst[pl.ds(row, tm), :] = hr.astype(jnp.bfloat16)

    @pl.when(l == n_gcn)
    def _output_linear():
        o_ref[...] = (
            jnp.dot(x_src[pl.ds(row, tm), :], w,
                    preferred_element_type=jnp.float32) + b
        ).astype(o_ref.dtype)


def _fused_forward(a_hat_bf16, x_pad_bf16, w_stack, b_stack, *, tm):
    np_, fp = x_pad_bf16.shape
    n_steps = w_stack.shape[0]              # n_layers + 1 (last = output Linear)
    n_gcn = n_steps - 1
    n_tiles = np_ // tm
    last_tile = n_tiles - 1

    kernel = functools.partial(_fused_gcn_kernel, tm=tm)
    grid_spec = pltpu.PrefetchScalarGridSpec(
        num_scalar_prefetch=0,
        grid=(n_steps, n_tiles),
        in_specs=[
            # A_hat row tile (pipelined).  Block index is frozen during the
            # final Linear step -> no extra HBM pass over A for that step.
            pl.BlockSpec((tm, np_),
                         lambda l, i: (jnp.where(l < n_gcn, i, last_tile), 0)),
            # Input features: constant block index -> fetched once, resident.
            pl.BlockSpec((np_, fp), lambda l, i: (0, 0)),
            # Per-step weight / bias, selected by the layer grid axis.
            pl.BlockSpec((1, fp, fp), lambda l, i: (l, 0, 0)),
            pl.BlockSpec((1, 1, fp), lambda l, i: (l, 0, 0)),
        ],
        # Output block index only varies during the final Linear step, so the
        # logits buffer is written back exactly once (no stale writebacks).
        out_specs=pl.BlockSpec((tm, fp),
                               lambda l, i: (jnp.where(l == n_gcn, i, 0), 0)),
        scratch_shapes=[
            pltpu.VMEM((2, np_, fp), jnp.bfloat16),   # ping-pong resident X
        ],
    )
    return pl.pallas_call(
        kernel,
        grid_spec=grid_spec,
        out_shape=jax.ShapeDtypeStruct((np_, fp), jnp.float32),
        compiler_params=pltpu.CompilerParams(
            # Both axes must be sequential: every layer needs the full
            # previous-layer features, which live in per-core VMEM scratch.
            dimension_semantics=("arbitrary", "arbitrary"),
            vmem_limit_bytes=_vmem_limit_bytes(),
        ),
    )(a_hat_bf16, x_pad_bf16, w_stack, b_stack)


# ---------------------------------------------------------------------------
# Model: parameter init, packing, forward (and graph normalization glue).
# ---------------------------------------------------------------------------

def init_params(key, input_dim, hid_dim, n_classes, n_layers):
    """Glorot-uniform init matching the module's layer shapes (biases zero)."""
    assert n_layers > 0
    params = {"gcn_w": [], "gcn_b": []}
    dims = [input_dim] + [hid_dim] * n_layers
    for i in range(n_layers):
        key, kw = jax.random.split(key)
        fan_in, fan_out = dims[i], dims[i + 1]
        limit = (6.0 / (fan_in + fan_out)) ** 0.5
        params["gcn_w"].append(
            jax.random.uniform(kw, (fan_in, fan_out), jnp.float32, -limit, limit))
        params["gcn_b"].append(jnp.zeros((fan_out,), jnp.float32))
    key, kw = jax.random.split(key)
    limit = (6.0 / (hid_dim + n_classes)) ** 0.5
    # nn.Linear weight is [n_classes, hid_dim]; store transposed as [hid, classes].
    params["out_w"] = jax.random.uniform(
        kw, (hid_dim, n_classes), jnp.float32, -limit, limit)
    params["out_b"] = jnp.zeros((n_classes,), jnp.float32)
    return params


def pack_params(params, fp):
    """Zero-pad every weight to [FP, FP] / bias to [FP] and stack along layers.

    Slot n_layers (the last one) is the output nn.Linear.  Weights are bf16
    (f32 accumulation happens on the MXU); biases stay f32.
    """
    ws, bs = [], []
    for w, b in zip(params["gcn_w"] + [params["out_w"]],
                    params["gcn_b"] + [params["out_b"]]):
        wp = jnp.zeros((fp, fp), jnp.float32).at[:w.shape[0], :w.shape[1]].set(w)
        bp = jnp.zeros((fp,), jnp.float32).at[:b.shape[0]].set(b)
        ws.append(wp.astype(jnp.bfloat16))
        bs.append(bp)
    return jnp.stack(ws), jnp.stack(bs)[:, None, :]


def normalize_adjacency(adj):
    """A_hat = D^-1/2 (A + I) D^-1/2 (dense, float32). Plain-JAX glue."""
    n = adj.shape[0]
    a = adj + jnp.eye(n, dtype=jnp.float32)
    deg = jnp.sum(a, axis=1)
    d_inv_sqrt = jnp.where(deg > 0, 1.0 / jnp.sqrt(deg), 0.0)
    return a * d_inv_sqrt[:, None] * d_inv_sqrt[None, :]


@functools.partial(jax.jit, static_argnames=("tm", "n_classes"))
def base_model_forward(w_stack, b_stack, x, a_hat, *, tm, n_classes):
    """apply_gcn_layers (eval mode) + output_layer, fused into one Pallas call."""
    n, f_in = x.shape
    fp = w_stack.shape[-1]
    np_base = _round_up(max(n, 8), 8)
    tm_eff = max(8, min(_round_up(tm, 8), np_base))   # clamp tile to graph size
    np_ = _round_up(np_base, tm_eff)
    # Zero padding is exact: padded nodes have zero adjacency columns so they
    # never contaminate real rows; padded feature lanes stay exactly zero.
    x_pad = jnp.zeros((np_, fp), jnp.bfloat16).at[:n, :f_in].set(
        x.astype(jnp.bfloat16))
    a_pad = jnp.zeros((np_, np_), jnp.float32).at[:n, :n].set(a_hat)
    logits_pad = _fused_forward(a_pad.astype(jnp.bfloat16), x_pad,
                                w_stack, b_stack, tm=tm_eff)
    return logits_pad[:n, :n_classes]


def _reference_forward(params, x, a_hat, n_layers):
    """Plain-JAX reference mirroring the kernel math exactly:
    bf16 operands / f32 MXU accumulation, (A@X)@W reassociation, bf16 residents."""
    a_bf = a_hat.astype(jnp.bfloat16)
    h_bf = x.astype(jnp.bfloat16)
    for i in range(n_layers):
        res = h_bf
        ax = jnp.dot(a_bf, h_bf, preferred_element_type=jnp.float32)
        w_bf = params["gcn_w"][i].astype(jnp.bfloat16)
        h = jnp.dot(ax.astype(jnp.bfloat16), w_bf,
                    preferred_element_type=jnp.float32)
        h = jnp.maximum(h + params["gcn_b"][i][None, :], 0.0)
        if i > 0:
            h = h + res.astype(jnp.float32)
        h_bf = h.astype(jnp.bfloat16)
    w_out = params["out_w"].astype(jnp.bfloat16)
    return (jnp.dot(h_bf, w_out, preferred_element_type=jnp.float32)
            + params["out_b"][None, :])


# ---------------------------------------------------------------------------
# Example run
# ---------------------------------------------------------------------------

if __name__ == "__main__":
    N = 64          # number of graph nodes
    INPUT_DIM = 16
    HID_DIM = 32
    N_CLASSES = 8
    N_LAYERS = 3
    TM = 256        # A_hat row-tile size; clamped to one tile at this toy N

    key = jax.random.PRNGKey(0)
    k_x, k_a, k_p = jax.random.split(key, 3)

    # Node features [N, input_dim]
    x = jax.random.normal(k_x, (N, INPUT_DIM), jnp.float32)

    # Random symmetric adjacency (~10% density), then GCN normalization
    raw = jax.random.uniform(k_a, (N, N))
    adj = (raw < 0.1).astype(jnp.float32)
    adj = jnp.maximum(adj, adj.T)
    adj = adj * (1.0 - jnp.eye(N, dtype=jnp.float32))
    a_hat = normalize_adjacency(adj)

    params = init_params(k_p, INPUT_DIM, HID_DIM, N_CLASSES, N_LAYERS)
    FP = _round_up(max(INPUT_DIM, HID_DIM, N_CLASSES, LANE), LANE)
    w_stack, b_stack = pack_params(params, FP)

    logits = base_model_forward(w_stack, b_stack, x, a_hat,
                                tm=TM, n_classes=N_CLASSES)
    logits = jax.block_until_ready(logits)

    # Sanity check against a plain-JAX reference using the same precision.
    ref = _reference_forward(params, x, a_hat, N_LAYERS)
    assert logits.shape == (N, N_CLASSES)
    assert logits.dtype == jnp.float32
    assert bool(jnp.all(jnp.isfinite(logits)))
    max_err = float(jnp.max(jnp.abs(logits - ref)))
    assert max_err < 1e-2, f"max abs error vs reference: {max_err}"
    print("KERNEL_OK")
</pallas_src>

<mosaic_0001>
module attributes {stable_mosaic.version = 11 : i64} {
  func.func @_fused_gcn_kernel(%arg0: i32, %arg1: i32, %arg2: memref<64x64xbf16, #tpu.memory_space<vmem>>, %arg3: memref<64x128xbf16, #tpu.memory_space<vmem>>, %arg4: memref<1x128x128xbf16, #tpu.memory_space<vmem>>, %arg5: memref<1x1x128xf32, #tpu.memory_space<vmem>>, %arg6: memref<64x128xf32, #tpu.memory_space<vmem>>, %arg7: memref<2x64x128xbf16, #tpu.memory_space<vmem>>) attributes {dimension_semantics = [#tpu.dimension_semantics<arbitrary>, #tpu.dimension_semantics<arbitrary>], iteration_bounds = array<i64: 4, 1>, scalar_prefetch = 0 : i64, scratch_operands = 1 : i64, tpu.core_type = #tpu.core_type<tc>, window_params = [{transform_indices = @transform_0, window_bounds = array<i64: 64, 64>}, {pipeline_mode = #tpu.pipeline_mode<synchronous>, transform_indices = @transform_1, window_bounds = array<i64: 64, 128>}, {transform_indices = @transform_2, window_bounds = array<i64: 1, 128, 128>}, {transform_indices = @transform_3, window_bounds = array<i64: 1, 1, 128>}, {transform_indices = @transform_4, window_bounds = array<i64: 64, 128>}]} {
    %c64_i32 = arith.constant 64 : i32
    %0 = arith.muli %arg1, %c64_i32 : i32
    %1 = tpu.assume_multiple %0, 64 : i32
    %c2_i32 = arith.constant 2 : i32
    %c0_i32 = arith.constant 0 : i32
    %2 = arith.cmpi eq, %c2_i32, %c0_i32 : i32
    %c1_i32 = arith.constant 1 : i32
    %3 = arith.select %2, %c1_i32, %c2_i32 : i32
    %4 = arith.remsi %arg0, %3 : i32
    %c0_i32_0 = arith.constant 0 : i32
    %5 = arith.cmpi ne, %4, %c0_i32_0 : i32
    %c0_i32_1 = arith.constant 0 : i32
    %6 = arith.cmpi slt, %4, %c0_i32_1 : i32
    %c0_i32_2 = arith.constant 0 : i32
    %7 = arith.cmpi slt, %3, %c0_i32_2 : i32
    %8 = arith.xori %6, %7 : i1
    %9 = arith.andi %8, %5 : i1
    %10 = arith.addi %4, %3 : i32
    %11 = arith.select %9, %10, %4 : i32
    %c1_i32_3 = arith.constant 1 : i32
    %12 = arith.addi %arg0, %c1_i32_3 : i32
    %c2_i32_4 = arith.constant 2 : i32
    %c0_i32_5 = arith.constant 0 : i32
    %13 = arith.cmpi eq, %c2_i32_4, %c0_i32_5 : i32
    %c1_i32_6 = arith.constant 1 : i32
    %14 = arith.select %13, %c1_i32_6, %c2_i32_4 : i32
    %15 = arith.remsi %12, %14 : i32
    %c0_i32_7 = arith.constant 0 : i32
    %16 = arith.cmpi ne, %15, %c0_i32_7 : i32
    %c0_i32_8 = arith.constant 0 : i32
    %17 = arith.cmpi slt, %15, %c0_i32_8 : i32
    %c0_i32_9 = arith.constant 0 : i32
    %18 = arith.cmpi slt, %14, %c0_i32_9 : i32
    %19 = arith.xori %17, %18 : i1
    %20 = arith.andi %19, %16 : i1
    %21 = arith.addi %15, %14 : i32
    %22 = arith.select %20, %21, %15 : i32
    %c0_i32_10 = arith.constant 0 : i32
    %23 = arith.cmpi eq, %arg0, %c0_i32_10 : i32
    %c0_i32_11 = arith.constant 0 : i32
    %24 = arith.cmpi eq, %arg1, %c0_i32_11 : i32
    %25 = arith.andi %23, %24 : i1
    %26 = arith.extui %25 : i1 to i32
    %c0_i32_12 = arith.constant 0 : i32
    %27 = arith.cmpi ne, %26, %c0_i32_12 : i32
    scf.if %27 {
      %c0_21 = arith.constant 0 : index
      %c0_22 = arith.constant 0 : index
      %38 = vector.load %arg3[%c0_21, %c0_22] : memref<64x128xbf16, #tpu.memory_space<vmem>>, vector<64x128xbf16>
      %c0_23 = arith.constant 0 : index
      %c0_24 = arith.constant 0 : index
      %c0_25 = arith.constant 0 : index
      %39 = vector.load %arg7[%c0_23, %c0_24, %c0_25] : memref<2x64x128xbf16, #tpu.memory_space<vmem>>, vector<1x64x128xbf16>
      %40 = vector.shape_cast %39 : vector<1x64x128xbf16> to vector<64x128xbf16>
      %41 = vector.shape_cast %38 : vector<64x128xbf16> to vector<1x64x128xbf16>
      tpu.vector_store %arg7[%c0_23, %c0_24, %c0_25], %41 {strides = array<i32>} : memref<2x64x128xbf16, #tpu.memory_space<vmem>>, vector<1x64x128xbf16>,
    } else {
    }
    %c0 = arith.constant 0 : index
    %c0_13 = arith.constant 0 : index
    %c0_14 = arith.constant 0 : index
    %28 = vector.load %arg4[%c0, %c0_13, %c0_14] : memref<1x128x128xbf16, #tpu.memory_space<vmem>>, vector<1x128x128xbf16>
    %29 = vector.shape_cast %28 : vector<1x128x128xbf16> to vector<128x128xbf16>
    %c0_15 = arith.constant 0 : index
    %c0_16 = arith.constant 0 : index
    %c0_17 = arith.constant 0 : index
    %30 = vector.load %arg5[%c0_15, %c0_16, %c0_17] : memref<1x1x128xf32, #tpu.memory_space<vmem>>, vector<1x1x128xf32>
    %31 = vector.shape_cast %30 : vector<1x1x128xf32> to vector<1x128xf32>
    %c3_i32 = arith.constant 3 : i32
    %32 = arith.cmpi slt, %arg0, %c3_i32 : i32
    %33 = arith.extui %32 : i1 to i32
    %c0_i32_18 = arith.constant 0 : i32
    %34 = arith.cmpi ne, %33, %c0_i32_18 : i32
    scf.if %34 {
      %c0_21 = arith.constant 0 : index
      %c0_22 = arith.constant 0 : index
      %38 = vector.load %arg2[%c0_21, %c0_22] : memref<64x64xbf16, #tpu.memory_space<vmem>>, vector<64x64xbf16>
      %39 = arith.index_cast %11 : i32 to index
      %c0_23 = arith.constant 0 : index
      %c0_24 = arith.constant 0 : index
      %40 = vector.load %arg7[%39, %c0_23, %c0_24] : memref<2x64x128xbf16, #tpu.memory_space<vmem>>, vector<1x64x128xbf16>
      %41 = vector.shape_cast %40 : vector<1x64x128xbf16> to vector<64x128xbf16>
      %cst = arith.constant dense<0.000000e+00> : vector<64x128xf32>
      %42 = tpu.matmul %38, %41, %cst {dimension_numbers = #tpu.dot_dimension_numbers<[1], [0], [0], [1], [0, 0, 1, 1], [], []>} : vector<64x64xbf16>, vector<64x128xbf16>, vector<64x128xf32> -> vector<64x128xf32>
      %43 = arith.truncf %42 : vector<64x128xf32> to vector<64x128xbf16>
      %cst_25 = arith.constant dense<0.000000e+00> : vector<64x128xf32>
      %44 = tpu.matmul %43, %29, %cst_25 {dimension_numbers = #tpu.dot_dimension_numbers<[1], [0], [0], [1], [0, 0, 1, 1], [], []>} : vector<64x128xbf16>, vector<128x128xbf16>, vector<64x128xf32> -> vector<64x128xf32>
      %45 = vector.broadcast %31 : vector<1x128xf32> to vector<64x128xf32>
      %46 = arith.addf %44, %45 : vector<64x128xf32>
      %cst_26 = arith.constant 0.000000e+00 : f32
      %47 = vector.broadcast %cst_26 : f32 to vector<64x128xf32>
      %48 = arith.maximumf %46, %47 : vector<64x128xf32>
      %c0_i32_27 = arith.constant 0 : i32
      %49 = arith.cmpi eq, %arg0, %c0_i32_27 : i32
      %50 = arith.extui %49 : i1 to i32
      %c0_i32_28 = arith.constant 0 : i32
      %51 = arith.cmpi ne, %50, %c0_i32_28 : i32
      scf.if %51 {
        %55 = arith.truncf %48 : vector<64x128xf32> to vector<64x128xbf16>
        %c0_i32_31 = arith.constant 0 : i32
        %c0_i32_32 = arith.constant 0 : i32
        %56 = tpu.memref_slice %arg7[%22, %c0_i32_31, %c0_i32_32] : memref<2x64x128xbf16, #tpu.memory_space<vmem>> -> memref<1x64x128xbf16, #tpu.memory_space<vmem>>
        %57 = tpu.memref_squeeze %56 : memref<1x64x128xbf16, #tpu.memory_space<vmem>> -> memref<64x128xbf16, #tpu.memory_space<vmem>>
        %58 = arith.index_cast %1 : i32 to index
        %c0_33 = arith.constant 0 : index
        %59 = vector.load %57[%58, %c0_33] : memref<64x128xbf16, #tpu.memory_space<vmem>>, vector<64x128xbf16>
        tpu.vector_store %57[%58, %c0_33], %55 {strides = array<i32>} : memref<64x128xbf16, #tpu.memory_space<vmem>>, vector<64x128xbf16>,
      } else {
      }
      %c0_i32_29 = arith.constant 0 : i32
      %52 = arith.cmpi sgt, %arg0, %c0_i32_29 : i32
      %53 = arith.extui %52 : i1 to i32
      %c0_i32_30 = arith.constant 0 : i32
      %54 = arith.cmpi ne, %53, %c0_i32_30 : i32
      scf.if %54 {
        %c0_i32_31 = arith.constant 0 : i32
        %c0_i32_32 = arith.constant 0 : i32
        %55 = tpu.memref_slice %arg7[%11, %c0_i32_31, %c0_i32_32] : memref<2x64x128xbf16, #tpu.memory_space<vmem>> -> memref<1x64x128xbf16, #tpu.memory_space<vmem>>
        %56 = tpu.memref_squeeze %55 : memref<1x64x128xbf16, #tpu.memory_space<vmem>> -> memref<64x128xbf16, #tpu.memory_space<vmem>>
        %57 = arith.index_cast %1 : i32 to index
        %c0_33 = arith.constant 0 : index
        %58 = vector.load %56[%57, %c0_33] : memref<64x128xbf16, #tpu.memory_space<vmem>>, vector<64x128xbf16>
        %59 = arith.extf %58 : vector<64x128xbf16> to vector<64x128xf32>
        %60 = arith.addf %48, %59 : vector<64x128xf32>
        %61 = arith.truncf %60 : vector<64x128xf32> to vector<64x128xbf16>
        %c0_i32_34 = arith.constant 0 : i32
        %c0_i32_35 = arith.constant 0 : i32
        %62 = tpu.memref_slice %arg7[%22, %c0_i32_34, %c0_i32_35] : memref<2x64x128xbf16, #tpu.memory_space<vmem>> -> memref<1x64x128xbf16, #tpu.memory_space<vmem>>
        %63 = tpu.memref_squeeze %62 : memref<1x64x128xbf16, #tpu.memory_space<vmem>> -> memref<64x128xbf16, #tpu.memory_space<vmem>>
        %64 = arith.index_cast %1 : i32 to index
        %c0_36 = arith.constant 0 : index
        %65 = vector.load %63[%64, %c0_36] : memref<64x128xbf16, #tpu.memory_space<vmem>>, vector<64x128xbf16>
        tpu.vector_store %63[%64, %c0_36], %61 {strides = array<i32>} : memref<64x128xbf16, #tpu.memory_space<vmem>>, vector<64x128xbf16>,
      } else {
      }
    } else {
    }
    %c3_i32_19 = arith.constant 3 : i32
    %35 = arith.cmpi eq, %arg0, %c3_i32_19 : i32
    %36 = arith.extui %35 : i1 to i32
    %c0_i32_20 = arith.constant 0 : i32
    %37 = arith.cmpi ne, %36, %c0_i32_20 : i32
    scf.if %37 {
      %c0_i32_21 = arith.constant 0 : i32
      %c0_i32_22 = arith.constant 0 : i32
      %38 = tpu.memref_slice %arg7[%11, %c0_i32_21, %c0_i32_22] : memref<2x64x128xbf16, #tpu.memory_space<vmem>> -> memref<1x64x128xbf16, #tpu.memory_space<vmem>>
      %39 = tpu.memref_squeeze %38 : memref<1x64x128xbf16, #tpu.memory_space<vmem>> -> memref<64x128xbf16, #tpu.memory_space<vmem>>
      %40 = arith.index_cast %1 : i32 to index
      %c0_23 = arith.constant 0 : index
      %41 = vector.load %39[%40, %c0_23] : memref<64x128xbf16, #tpu.memory_space<vmem>>, vector<64x128xbf16>
      %cst = arith.constant dense<0.000000e+00> : vector<64x128xf32>
      %42 = tpu.matmul %41, %29, %cst {dimension_numbers = #tpu.dot_dimension_numbers<[1], [0], [0], [1], [0, 0, 1, 1], [], []>} : vector<64x128xbf16>, vector<128x128xbf16>, vector<64x128xf32> -> vector<64x128xf32>
      %43 = vector.broadcast %31 : vector<1x128xf32> to vector<64x128xf32>
      %44 = arith.addf %42, %43 : vector<64x128xf32>
      %c0_24 = arith.constant 0 : index
      %c0_25 = arith.constant 0 : index
      %45 = vector.load %arg6[%c0_24, %c0_25] : memref<64x128xf32, #tpu.memory_space<vmem>>, vector<64x128xf32>
      tpu.vector_store %arg6[%c0_24, %c0_25], %44 {strides = array<i32>} : memref<64x128xf32, #tpu.memory_space<vmem>>, vector<64x128xf32>,
    } else {
    }
    return
  }
  func.func @transform_0(%arg0: i32, %arg1: i32) -> (i32, i32) {
    %c3_i32 = arith.constant 3 : i32
    %0 = arith.cmpi slt, %arg0, %c3_i32 : i32
    %c0_i32 = arith.constant 0 : i32
    %1 = arith.select %0, %arg1, %c0_i32 : i32
    %c0_i32_0 = arith.constant 0 : i32
    %c0_i32_1 = arith.constant 0 : i32
    return %1, %c0_i32_0 : i32, i32
  }
  func.func @transform_1(%arg0: i32, %arg1: i32) -> (i32, i32) {
    %c0_i32 = arith.constant 0 : i32
    %c0_i32_0 = arith.constant 0 : i32
    %c0_i32_1 = arith.constant 0 : i32
    return %c0_i32, %c0_i32_0 : i32, i32
  }
  func.func @transform_2(%arg0: i32, %arg1: i32) -> (i32, i32, i32) {
    %c0_i32 = arith.constant 0 : i32
    %c0_i32_0 = arith.constant 0 : i32
    %c0_i32_1 = arith.constant 0 : i32
    return %arg0, %c0_i32, %c0_i32_0 : i32, i32, i32
  }
  func.func @transform_3(%arg0: i32, %arg1: i32) -> (i32, i32, i32) {
    %c0_i32 = arith.constant 0 : i32
    %c0_i32_0 = arith.constant 0 : i32
    %c0_i32_1 = arith.constant 0 : i32
    return %arg0, %c0_i32, %c0_i32_0 : i32, i32, i32
  }
  func.func @transform_4(%arg0: i32, %arg1: i32) -> (i32, i32) {
    %c3_i32 = arith.constant 3 : i32
    %0 = arith.cmpi eq, %arg0, %c3_i32 : i32
    %c0_i32 = arith.constant 0 : i32
    %1 = arith.select %0, %arg1, %c0_i32 : i32
    %c0_i32_0 = arith.constant 0 : i32
    %c0_i32_1 = arith.constant 0 : i32
    return %1, %c0_i32_0 : i32, i32
  }
}

</mosaic_0001>

<llo_original>
// kernel: base_model_forward.1
$region0: #{base_model_forward.1}
  #allocation0 [shape = 'u32[]', space=smem, size = 0x4, offset = 0x4, fixed_abs, tag = 'smem constant byte address 0x4 - core index']
  #allocation1 [shape = 'u32[144,128]{1,0:T(1,128)}', space=vmem, size = 0x12000, scoped, tag = 'internal scratch']
  #allocation2 [shape = 'bf16[2,64,128]{2,1,0:T(16,128)(2,1)}', space=vmem, size = 0x8000, scoped, tag = 'scratch operand']
  %s0 = inlined_call_operand.vmem [shape: bf16[64,64], index: 0, kind: input, shape index: {}]
  %s1 = inlined_call_operand.vmem [shape: bf16[64,128], index: 1, kind: input, shape index: {}]
  %s2 = inlined_call_operand.vmem [shape: bf16[4,128,128], index: 2, kind: input, shape index: {}]
  %s3 = inlined_call_operand.vmem [shape: f32[4,1,128], index: 3, kind: input, shape index: {}]
  %s4 = inlined_call_operand.vmem [shape: f32[64,128], index: 4, kind: output, shape index: {}]
  %s5 = sld [smem:[#allocation0]]
  $region69: #{base_model_forward.1} parent=0
    _
  %s7 = ssub.s32 1, %s5
  %s8 = scalar_select 0, %s7, %s5
  loop: start=0, step=1, limit=6
  $region2: #{base_model_forward.1} parent=0 // loop_pre_header
    _
  $region3: #{base_model_forward.1} parent=0 // loop_header
    %s10 = sphi 0, %s14
    %p11 = scmp.ge.s32.totalorder %s10, 6
    %s17 = sphi 0, %s29
    %s18 = sphi 0, %s25
    %s19 = sphi 0, %s17
    %s20 = sphi 0, %s18
    %s21 = sphi 0, %s19
    %s22 = sphi 0, %s20
    %s36 = sphi 0, %s38
    %s39 = sphi 0, %s36
    %s40 = sphi 0, %s39
    %s56 = sphi 0, %s40
    %s60 = sphi 0, %s60
    %s62 = sphi 0, %s60
    %s63 = sphi 0, %s62
    %s77 = sphi 0, %s63
    %s83 = sphi 0, %s85
    %s86 = sphi 0, %s83
    %s87 = sphi 0, %s86
    %s103 = sphi 0, %s87
    %s109 = sphi 0, %s111
    %s112 = sphi 0, %s109
    %s113 = sphi 0, %s112
    %s129 = sphi 0, %s113
    %s139 = sphi 0, %s141
    %s142 = sphi 0, %s139
    %s143 = sphi 0, %s142
    %s159 = sphi 0, %s143
  $region4: #{base_model_forward.1} parent=0 // loop_header_branch
    %13 = sbr.rel (%p11) target = $region8
  $region5: #{base_model_forward.1} parent=0 // loop_body
    %s15 = ssub.s32 %s10, 1
    %s16 = ssub.s32 %s10, 2
    %s23 = sadd.s32 1, %s18
    %p24 = scmp.ge.s32.totalorder %s23, 1
    %s25 = scalar_select %p24, 0, %s23
    %s26 = sadd.s32 1, %s17
    %s27 = scalar_select %p24, %s26, %s17
    %p28 = scmp.ge.s32.totalorder %s27, 4
    %s29 = scalar_select %p28, 0, %s27
    %p30 = scmp.lt.s32.totalorder %s17, 3
    %s31 = scalar_select %p30, %s18, 0
    %p32 = scmp.lt.s32.totalorder %s29, 3
    %s33 = scalar_select %p32, %s25, 0
    %s34 = ssub.s32 %s31, %s33
    %p35 = scmp.eq.s32.totalorder %s34, 0
    %s37 = sadd.s32 %s36, 1
    %s38 = scalar_select %p35, %s36, %s37
    %p41 = pneg %p35
    %p42 = scmp.eq.s32.totalorder %s10, 3
    %p43 = por %p41, %p42
    %p44 = scmp.ne.s32.totalorder %s36, %s39
    %p45 = scmp.eq.s32.totalorder %s10, 0
    %p46 = por %p44, %p45
    %p47 = scmp.ne.s32.totalorder %s36, %s39
    %p48 = scmp.eq.s32.totalorder %s15, 3
    %p49 = por %p47, %p48
    %p50 = scmp.ne.s32.totalorder %s39, %s40
    %p51 = scmp.eq.s32.totalorder %s15, 0
    %p52 = por %p50, %p51
    %p53 = scmp.ne.s32.totalorder %s39, %s40
    %p54 = scmp.eq.s32.totalorder %s16, 3
    %p55 = por %p53, %p54
    %p57 = scmp.ne.s32.totalorder %s40, %s56
    %p58 = scmp.eq.s32.totalorder %s16, 0
    %p59 = por %p57, %p58
    %s61 = sadd.s32 %s60, 1
    %p64 = scmp.eq.s32.totalorder %s10, 3
    %p65 = scmp.ne.s32.totalorder %s60, %s62
    %p66 = scmp.eq.s32.totalorder %s10, 0
    %p67 = por %p65, %p66
    %p68 = scmp.ne.s32.totalorder %s60, %s62
    %p69 = scmp.eq.s32.totalorder %s15, 3
    %p70 = por %p68, %p69
    %p71 = scmp.ne.s32.totalorder %s62, %s63
    %p72 = scmp.eq.s32.totalorder %s15, 0
    %p73 = por %p71, %p72
    %p74 = scmp.ne.s32.totalorder %s62, %s63
    %p75 = scmp.eq.s32.totalorder %s16, 3
    %p76 = por %p74, %p75
    %p78 = scmp.ne.s32.totalorder %s63, %s77
    %p79 = scmp.eq.s32.totalorder %s16, 0
    %p80 = por %p78, %p79
    %s81 = ssub.s32 %s17, %s29
    %p82 = scmp.eq.s32.totalorder %s81, 0
    %s84 = sadd.s32 %s83, 1
    %s85 = scalar_select %p82, %s83, %s84
    %p88 = pneg %p82
    %p89 = scmp.eq.s32.totalorder %s10, 3
    %p90 = por %p88, %p89
    %p91 = scmp.ne.s32.totalorder %s83, %s86
    %p92 = scmp.eq.s32.totalorder %s10, 0
    %p93 = por %p91, %p92
    %p94 = scmp.ne.s32.totalorder %s83, %s86
    %p95 = scmp.eq.s32.totalorder %s15, 3
    %p96 = por %p94, %p95
    %p97 = scmp.ne.s32.totalorder %s86, %s87
    %p98 = scmp.eq.s32.totalorder %s15, 0
    %p99 = por %p97, %p98
    %p100 = scmp.ne.s32.totalorder %s86, %s87
    %p101 = scmp.eq.s32.totalorder %s16, 3
    %p102 = por %p100, %p101
    %p104 = scmp.ne.s32.totalorder %s87, %s103
    %p105 = scmp.eq.s32.totalorder %s16, 0
    %p106 = por %p104, %p105
    %s107 = ssub.s32 %s17, %s29
    %p108 = scmp.eq.s32.totalorder %s107, 0
    %s110 = sadd.s32 %s109, 1
    %s111 = scalar_select %p108, %s109, %s110
    %p114 = pneg %p108
    %p115 = scmp.eq.s32.totalorder %s10, 3
    %p116 = por %p114, %p115
    %p117 = scmp.ne.s32.totalorder %s109, %s112
    %p118 = scmp.eq.s32.totalorder %s10, 0
    %p119 = por %p117, %p118
    %p120 = scmp.ne.s32.totalorder %s109, %s112
    %p121 = scmp.eq.s32.totalorder %s15, 3
    %p122 = por %p120, %p121
    %p123 = scmp.ne.s32.totalorder %s112, %s113
    %p124 = scmp.eq.s32.totalorder %s15, 0
    %p125 = por %p123, %p124
    %p126 = scmp.ne.s32.totalorder %s112, %s113
    %p127 = scmp.eq.s32.totalorder %s16, 3
    %p128 = por %p126, %p127
    %p130 = scmp.ne.s32.totalorder %s113, %s129
    %p131 = scmp.eq.s32.totalorder %s16, 0
    %p132 = por %p130, %p131
    %p133 = scmp.eq.s32.totalorder %s17, 3
    %s134 = scalar_select %p133, %s18, 0
    %p135 = scmp.eq.s32.totalorder %s29, 3
    %s136 = scalar_select %p135, %s25, 0
    %s137 = ssub.s32 %s134, %s136
    %p138 = scmp.eq.s32.totalorder %s137, 0
    %s140 = sadd.s32 %s139, 1
    %s141 = scalar_select %p138, %s139, %s140
    %p144 = pneg %p138
    %p145 = scmp.eq.s32.totalorder %s10, 3
    %p146 = por %p144, %p145
    %p147 = scmp.ne.s32.totalorder %s139, %s142
    %p148 = scmp.eq.s32.totalorder %s10, 0
    %p149 = por %p147, %p148
    %p150 = scmp.ne.s32.totalorder %s139, %s142
    %p151 = scmp.eq.s32.totalorder %s15, 3
    %p152 = por %p150, %p151
    %p153 = scmp.ne.s32.totalorder %s142, %s143
    %p154 = scmp.eq.s32.totalorder %s15, 0
    %p155 = por %p153, %p154
    %p156 = scmp.ne.s32.totalorder %s142, %s143
    %p157 = scmp.eq.s32.totalorder %s16, 3
    %p158 = por %p156, %p157
    %p160 = scmp.ne.s32.totalorder %s143, %s159
    %p161 = scmp.eq.s32.totalorder %s16, 0
    %p162 = por %p160, %p161
    %p163 = scmp.le.s32.totalorder 1, %s10
    %p164 = scmp.lt.s32.totalorder %s10, 5
    %p165 = pnand %p163, %p164
    %p166 = pneg %p165
    // Predicated region
    $region9: #{base_model_forward.1} parent=5 // pred_check
      _
    $region10: #{base_model_forward.1} parent=5 // pred_check_branch
      %168 = sbr.rel (%p165) target = $region12
    $region11: #{base_model_forward.1} parent=5 // pred_region
      %s169 = ssub.s32 %s10, 1
      // Predicated region
      $region13: #{base_model_forward.1} parent=11 // pred_check
        %p170 = pneg %p73
      $region14: #{base_model_forward.1} parent=11 // pred_check_branch
        %172 = sbr.rel (%p170) target = $region16
      $region15: #{base_model_forward.1} parent=11 // pred_region
        _
      $region16: #{base_model_forward.1} parent=11 // pred_fallthru
        _
    $region12: #{base_model_forward.1} parent=5 // pred_fallthru
      _
    %p173 = scmp.lt.s32.totalorder %s10, 4
    // Predicated region
    $region17: #{base_model_forward.1} parent=5 // pred_check
      %p174 = pneg %p173
    $region18: #{base_model_forward.1} parent=5 // pred_check_branch
      %176 = sbr.rel (%p174) target = $region20
    $region19: #{base_model_forward.1} parent=5 // pred_region
      // Predicated region
      $region21: #{base_model_forward.1} parent=19 // pred_check
        %p177 = pneg %p46
      $region22: #{base_model_forward.1} parent=19 // pred_check_branch
        %179 = sbr.rel (%p177) target = $region24
      $region23: #{base_model_forward.1} parent=19 // pred_region
        %p180 = scmp.lt.s32.totalorder %s17, 3
        %s181 = scalar_select %p180, %s18, 0
        %s182 = smul.u32 8, %s181
        %p183 = scmp.lt.s32.totalorder %s182, 7
        %s184 = scalar_select %p183, %s182, 7
        %s185 = smul.addr %s184, 4
        %s186 = scalar_lea.vmem %s0, %s185
        %p187 = scmp.lt.s32.totalorder %s17, 3
        %s188 = scalar_select %p187, %s18, 0
        %s189 = smul.u32 8, %s188
      $region24: #{base_model_forward.1} parent=19 // pred_fallthru
        _
      // Predicated region
      $region25: #{base_model_forward.1} parent=19 // pred_check
        %p190 = pneg %p93
      $region26: #{base_model_forward.1} parent=19 // pred_check_branch
        %192 = sbr.rel (%p190) target = $region28
      $region27: #{base_model_forward.1} parent=19 // pred_region
        %p193 = scmp.lt.s32.totalorder %s17, 3
        %s194 = scalar_select %p193, %s17, 3
        %s195 = smul.addr %s194, 16
        %s196 = smul.addr %s195, 4
        %s197 = scalar_lea.vmem %s2, %s196
      $region28: #{base_model_forward.1} parent=19 // pred_fallthru
        _
      // Predicated region
      $region29: #{base_model_forward.1} parent=19 // pred_check
        %p198 = pneg %p119
      $region30: #{base_model_forward.1} parent=19 // pred_check_branch
        %200 = sbr.rel (%p198) target = $region32
      $region31: #{base_model_forward.1} parent=19 // pred_region
        %p201 = scmp.lt.s32.totalorder %s17, 3
        %s202 = scalar_select %p201, %s17, 3
        %s203 = scalar_lea.vmem %s3, %s202
      $region32: #{base_model_forward.1} parent=19 // pred_fallthru
        _
    $region20: #{base_model_forward.1} parent=5 // pred_fallthru
      _
    %p204 = scmp.le.s32.totalorder 1, %s10
    %p205 = scmp.lt.s32.totalorder %s10, 5
    %p206 = pnand %p204, %p205
    %p207 = pneg %p206
    // Predicated region
    $region33: #{base_model_forward.1} parent=5 // pred_check
      _
    $region34: #{base_model_forward.1} parent=5 // pred_check_branch
      %209 = sbr.rel (%p206) target = $region36
    $region35: #{base_model_forward.1} parent=5 // pred_region
      %s210 = ssub.s32 %s10, 1
      %p211 = scmp.lt.s32.totalorder %s19, 3
      %s212 = scalar_select %p211, %s20, 0
      %s213 = smul.u32 8, %s212
      %p214 = scmp.lt.s32.totalorder %s213, 7
      %s215 = scalar_select %p214, %s213, 7
      %s216 = smul.addr %s215, 4
      %s217 = scalar_lea.vmem %s0, %s216
      %p218 = pneg %p52
      %p219 = pneg %p49
      %p220 = pneg %p73
      %p221 = pneg %p70
      %p222 = scmp.lt.s32.totalorder %s19, 3
      %s223 = scalar_select %p222, %s19, 3
      %s224 = smul.addr %s223, 16
      %s225 = smul.addr %s224, 4
      %s226 = scalar_lea.vmem %s2, %s225
      %p227 = pneg %p99
      %p228 = pneg %p96
      %p229 = scmp.lt.s32.totalorder %s19, 3
      %s230 = scalar_select %p229, %s19, 3
      %s231 = scalar_lea.vmem %s3, %s230
      %p232 = pneg %p125
      %p233 = pneg %p122
      %p234 = pneg %p155
      %p235 = pneg %p152
      %p236 = scmp.eq.s32.totalorder %s19, 3
      %s237 = scalar_select %p236, %s20, 0
      %s238 = smul.u32 8, %s237
      %p239 = scmp.lt.s32.totalorder %s238, 7
      %s240 = scalar_select %p239, %s238, 7
      %s241 = smul.addr %s240, 8
      %s242 = scalar_lea.vmem %s4, %s241
      %p243 = scmp.lt.s32.totalorder %s19, 3
      %s244 = scalar_select %p243, %s20, 0
      %s245 = smul.u32 8, %s244
      %p246 = scmp.lt.s32.totalorder %s245, 7
      %s247 = scalar_select %p246, %s245, 7
      %s248 = smul.addr %s247, 4
      %s249 = scalar_lea.vmem %s0, %s248
      %p250 = scmp.lt.s32.totalorder %s19, 3
      %s251 = scalar_select %p250, %s20, 0
      %s252 = smul.u32 8, %s251
      %p253 = scmp.lt.s32.totalorder %s19, 3
      %s254 = scalar_select %p253, %s19, 3
      %s255 = smul.addr %s254, 16
      %s256 = smul.addr %s255, 4
      %s257 = scalar_lea.vmem %s2, %s256
      %p258 = scmp.lt.s32.totalorder %s19, 3
      %s259 = scalar_select %p258, %s19, 3
      %s260 = scalar_lea.vmem %s3, %s259
      %p261 = scmp.eq.s32.totalorder %s19, 3
      %s262 = scalar_select %p261, %s20, 0
      %s263 = smul.u32 8, %s262
      %p264 = scmp.lt.s32.totalorder %s263, 7
      %s265 = scalar_select %p264, %s263, 7
      %s266 = smul.addr %s265, 8
      %s267 = scalar_lea.vmem %s4, %s266
      %p268 = scmp.eq.s32.totalorder %s19, 3
      %s269 = scalar_select %p268, %s20, 0
      %s270 = smul.u32 8, %s269
      %s272 = smul.u32 %s20, 64
      %p273 = scmp.lt.s32.totalorder %s19, 0
      %s274 = ssub.s32 0, %s19
      %s275 = scalar_select %p273, %s274, %s19
      %s276 = sand.u32 %s275, 1
      %s277 = ssub.s32 0, %s276
      %s278 = scalar_select %p273, %s277, %s276
      %p279 = scmp.ne.s32.totalorder %s278, 0
      %p280 = scmp.lt.s32.totalorder %s278, 0
      %p281 = pnand %p280, %p279
      %p282 = pneg %p281
      %s283 = sadd.s32 %s278, 2
      %s284 = scalar_select %p282, %s283, %s278
      %s285 = sadd.s32 %s19, 1
      %p286 = scmp.lt.s32.totalorder %s285, 0
      %s287 = ssub.s32 0, %s285
      %s288 = scalar_select %p286, %s287, %s285
      %s289 = sand.u32 %s288, 1
      %s290 = ssub.s32 0, %s289
      %s291 = scalar_select %p286, %s290, %s289
      %p292 = scmp.ne.s32.totalorder %s291, 0
      %p293 = scmp.lt.s32.totalorder %s291, 0
      %p294 = pnand %p293, %p292
      %p295 = pneg %p294
      %s296 = sadd.s32 %s291, 2
      %s297 = scalar_select %p295, %s296, %s291
      %p298 = scmp.eq.s32.totalorder %s19, 0
      %p299 = scmp.eq.s32.totalorder %s20, 0
      %p300 = pnand %p298, %p299
      %p301 = pneg %p300
      // Predicated region
      $region37: #{base_model_forward.1} parent=35 // pred_check
        _
      $region38: #{base_model_forward.1} parent=35 // pred_check_branch
        %303 = sbr.rel (%p300) target = $region40
      $region39: #{base_model_forward.1} parent=35 // pred_region
        %v304 = vld [vmem:[%s1] sm:$0xf]
        %v305 = vld [vmem:[%s1 + $0x4] sm:$0xf]
        %v306 = vld [vmem:[%s1 + $0x8] sm:$0xf]
        %v307 = vld [vmem:[%s1 + $0xc] sm:$0xf]
        %v308 = vld [vmem:[%s1 + $0x10] sm:$0xf]
        %v309 = vld [vmem:[%s1 + $0x14] sm:$0xf]
        %v310 = vld [vmem:[%s1 + $0x18] sm:$0xf]
        %v311 = vld [vmem:[%s1 + $0x1c] sm:$0xf]
        %v320 = vunpack.c.l.b16 %v304
        %v321 = vunpack.c.l.b16 %v305
        %v322 = vunpack.c.l.b16 %v306
        %v323 = vunpack.c.l.b16 %v307
        %v324 = vunpack.c.l.b16 %v308
        %v325 = vunpack.c.l.b16 %v309
        %v326 = vunpack.c.l.b16 %v310
        %v327 = vunpack.c.l.b16 %v311
        %v328 = vpack.c.b16 %v321, %v320
        %v329 = vpack.c.b16 %v323, %v322
        %v330 = vpack.c.b16 %v325, %v324
        %v331 = vpack.c.b16 %v327, %v326
        %336 = vst [vmem:[#allocation2] sm:$0xff] %v328
        %337 = vst [vmem:[#allocation2 + $0x8] sm:$0xff] %v329
        %338 = vst [vmem:[#allocation2 + $0x10] sm:$0xff] %v330
        %339 = vst [vmem:[#allocation2 + $0x18] sm:$0xff] %v331
      $region40: #{base_model_forward.1} parent=35 // pred_fallthru
        _
      %v340 = vld [vmem:[%s257] sm:$0xf]
      %v341 = vld [vmem:[%s257 + $0x4] sm:$0xf]
      %v342 = vld [vmem:[%s257 + $0x8] sm:$0xf]
      %v343 = vld [vmem:[%s257 + $0xc] sm:$0xf]
      %v344 = vld [vmem:[%s257 + $0x10] sm:$0xf]
      %v345 = vld [vmem:[%s257 + $0x14] sm:$0xf]
      %v346 = vld [vmem:[%s257 + $0x18] sm:$0xf]
      %v347 = vld [vmem:[%s257 + $0x1c] sm:$0xf]
      %v348 = vld [vmem:[%s257 + $0x20] sm:$0xf]
      %v349 = vld [vmem:[%s257 + $0x24] sm:$0xf]
      %v350 = vld [vmem:[%s257 + $0x28] sm:$0xf]
      %v351 = vld [vmem:[%s257 + $0x2c] sm:$0xf]
      %v352 = vld [vmem:[%s257 + $0x30] sm:$0xf]
      %v353 = vld [vmem:[%s257 + $0x34] sm:$0xf]
      %v354 = vld [vmem:[%s257 + $0x38] sm:$0xf]
      %v355 = vld [vmem:[%s257 + $0x3c] sm:$0xf]
      %v356 = vld [vmem:[%s260] sm:$0x1]
      %p357 = scmp.lt.s32.totalorder %s19, 3
      // Predicated region
      $region41: #{base_model_forward.1} parent=35 // pred_check
        %p358 = pneg %p357
      $region42: #{base_model_forward.1} parent=35 // pred_check_branch
        %360 = sbr.rel (%p358) target = $region44
      $region43: #{base_model_forward.1} parent=35 // pred_region
        %v361 = vld [vmem:[%s249] sm:$0xf]
        %v362 = vld [vmem:[%s249 + $0x4] sm:$0xf]
        %v363 = vld [vmem:[%s249 + $0x8] sm:$0xf]
        %v364 = vld [vmem:[%s249 + $0xc] sm:$0xf]
        %v365 = vld [vmem:[%s249 + $0x10] sm:$0xf]
        %v366 = vld [vmem:[%s249 + $0x14] sm:$0xf]
        %v367 = vld [vmem:[%s249 + $0x18] sm:$0xf]
        %v368 = vld [vmem:[%s249 + $0x1c] sm:$0xf]
        %s369 = smul.u32 %s284, 4
        %s370 = smul.addr %s369, 8
        %s371 = scalar_lea.vmem [#allocation2], %s370
        %v372 = vld [vmem:[%s371] sm:$0xff]
        %v373 = vld [vmem:[%s371 + $0x8] sm:$0xff]
        %v374 = vld [vmem:[%s371 + $0x10] sm:$0xff]
        %v375 = vld [vmem:[%s371 + $0x18] sm:$0xff]
        %v384 = vunpack.c.l.b16 %v361
        %v385 = vunpack.c.l.b16 %v362
        %v386 = vunpack.c.l.b16 %v363
        %v387 = vunpack.c.l.b16 %v364
        %v388 = vunpack.c.l.b16 %v365
        %v389 = vunpack.c.l.b16 %v366
        %v390 = vunpack.c.l.b16 %v367
        %v391 = vunpack.c.l.b16 %v368
        %v392 = vpack.c.b16 %v385, %v384
        %v393 = vpack.c.b16 %v387, %v386
        %v394 = vpack.c.b16 %v389, %v388
        %v395 = vpack.c.b16 %v391, %v390
        %vm396 = vcmask 523264
        %v398 = vsel %vm396, %v392, 0
        %v401 = vsel %vm396, %v393, 0
        %v404 = vsel %vm396, %v394, 0
        %v407 = vsel %vm396, %v395, 0
        %409 = vmatprep.subr.bf16.mxu0 0
        %410 = vmatpush1.bf16.msra.mxu0 %v372
        %411 = vmatprep.subr.bf16.mxu0 0
        %412 = vmatpush1.bf16.msra.mxu0 %v373
        %413 = vmatprep.subr.bf16.mxu0 0
        %414 = vmatpush1.bf16.msra.mxu0 %v374
        %415 = vmatprep.subr.bf16.mxu0 0
        %416 = vmatpush1.bf16.msra.mxu0 %v375
        %417 = vmatprep.subr.bf16.mxu0 0
        %418 = vmatpush1.bf16.msra.mxu0 0
        %419 = vmatprep.subr.bf16.mxu0 0
        %420 = vmatpush1.bf16.msra.mxu0 0
        %421 = vmatprep.subr.bf16.mxu0 0
        %422 = vmatpush1.bf16.msra.mxu0 0
        %423 = vmatprep.subr.bf16.mxu0 0
        %424 = vmatpush1.bf16.msra.mxu0 0
        %425 = vmatprep.subr.bf16.mxu0 0
        %426 = vmatpush1.bf16.msra.mxu0 0
        %427 = vmatprep.subr.bf16.mxu0 0
        %428 = vmatpush1.bf16.msra.mxu0 0
        %429 = vmatprep.subr.bf16.mxu0 0
        %430 = vmatpush1.bf16.msra.mxu0 0
        %431 = vmatprep.subr.bf16.mxu0 0
        %432 = vmatpush1.bf16.msra.mxu0 0
        %433 = vmatprep.subr.bf16.mxu0 0
        %434 = vmatpush1.bf16.msra.mxu0 0
        %435 = vmatprep.subr.bf16.mxu0 0
        %436 = vmatpush1.bf16.msra.mxu0 0
        %437 = vmatprep.subr.bf16.mxu0 0
        %438 = vmatpush1.bf16.msra.mxu0 0
        %439 = vmatprep.subr.bf16.mxu0 0
        %440 = vmatpush1.bf16.msra.mxu0 0
        %441 = vmatprep.mubr.bf16.mxu0 0
        %442 = vmatmul.mubr.bf16.gmra.mrb[0].mxu0 %v398
        %v443 = vpop.f32.mrb[0].mxu0
        %v444 = vadd.f32 0.0, %v443
        %v445 = vpop.f32.mrb[0].mxu0
        %v446 = vpop.f32.mrb[0].mxu0
        %v447 = vadd.f32 0.0, %v446
        %v448 = vpop.f32.mrb[0].mxu0
        %449 = vmatprep.mubr.bf16.mxu0 0
        %450 = vmatmul.mubr.bf16.gmra.mrb[0].mxu0 %v401
        %v451 = vpop.f32.mrb[0].mxu0
        %v452 = vadd.f32 0.0, %v451
        %v453 = vpop.f32.mrb[0].mxu0
        %v454 = vpop.f32.mrb[0].mxu0
        %v455 = vadd.f32 0.0, %v454
        %v456 = vpop.f32.mrb[0].mxu0
        %457 = vmatprep.mubr.bf16.mxu0 0
        %458 = vmatmul.mubr.bf16.gmra.mrb[0].mxu0 %v404
        %v459 = vpop.f32.mrb[0].mxu0
        %v460 = vadd.f32 0.0, %v459
        %v461 = vpop.f32.mrb[0].mxu0
        %v462 = vpop.f32.mrb[0].mxu0
        %v463 = vadd.f32 0.0, %v462
        %v464 = vpop.f32.mrb[0].mxu0
        %465 = vmatprep.mubr.bf16.mxu0 0
        %466 = vmatmul.mubr.bf16.gmra.mrb[0].mxu0 %v407
        %v467 = vpop.f32.mrb[0].mxu0
        %v468 = vadd.f32 0.0, %v467
        %v469 = vpop.f32.mrb[0].mxu0
        %v470 = vpop.f32.mrb[0].mxu0
        %v471 = vadd.f32 0.0, %v470
        %v472 = vpop.f32.mrb[0].mxu0
        %473 = vdwg.mxu0
        %v474 = vpack.c.bf16 %v447, %v444
        %v475 = vpack.c.bf16 %v455, %v452
        %v476 = vpack.c.bf16 %v463, %v460
        %v477 = vpack.c.bf16 %v471, %v468
        %v479 = vlaneseq
        %v480 = vshrl.u32 %v479, 7
        %v481 = vsub.s32 0, %v480
        %v482 = vrot.slane %v356, %v481
        %v500 = vunpack.c.l.b16 %v340
        %v501 = vunpack.c.l.b16 %v341
        %v502 = vunpack.c.l.b16 %v342
        %v503 = vunpack.c.l.b16 %v343
        %v504 = vunpack.c.l.b16 %v344
        %v505 = vunpack.c.l.b16 %v345
        %v506 = vunpack.c.l.b16 %v346
        %v507 = vunpack.c.l.b16 %v347
        %v508 = vunpack.c.l.b16 %v348
        %v509 = vunpack.c.l.b16 %v349
        %v510 = vunpack.c.l.b16 %v350
        %v511 = vunpack.c.l.b16 %v351
        %v512 = vunpack.c.l.b16 %v352
        %v513 = vunpack.c.l.b16 %v353
        %v514 = vunpack.c.l.b16 %v354
        %v515 = vunpack.c.l.b16 %v355
        %v516 = vpack.c.b16 %v501, %v500
        %v517 = vpack.c.b16 %v503, %v502
        %v518 = vpack.c.b16 %v505, %v504
        %v519 = vpack.c.b16 %v507, %v506
        %v520 = vpack.c.b16 %v509, %v508
        %v521 = vpack.c.b16 %v511, %v510
        %v522 = vpack.c.b16 %v513, %v512
        %v523 = vpack.c.b16 %v515, %v514
        %532 = vmatprep.subr.bf16.mxu0 0
        %533 = vmatpush1.bf16.msra.mxu0 %v516
        %534 = vmatprep.subr.bf16.mxu0 0
        %535 = vmatpush1.bf16.msra.mxu0 %v517
        %536 = vmatprep.subr.bf16.mxu0 0
        %537 = vmatpush1.bf16.msra.mxu0 %v518
        %538 = vmatprep.subr.bf16.mxu0 0
        %539 = vmatpush1.bf16.msra.mxu0 %v519
        %540 = vmatprep.subr.bf16.mxu0 0
        %541 = vmatpush1.bf16.msra.mxu0 %v520
        %542 = vmatprep.subr.bf16.mxu0 0
        %543 = vmatpush1.bf16.msra.mxu0 %v521
        %544 = vmatprep.subr.bf16.mxu0 0
        %545 = vmatpush1.bf16.msra.mxu0 %v522
        %546 = vmatprep.subr.bf16.mxu0 0
        %547 = vmatpush1.bf16.msra.mxu0 %v523
        %548 = vmatprep.subr.bf16.mxu0 0
        %549 = vmatpush1.bf16.msra.mxu0 0
        %550 = vmatprep.subr.bf16.mxu0 0
        %551 = vmatpush1.bf16.msra.mxu0 0
        %552 = vmatprep.subr.bf16.mxu0 0
        %553 = vmatpush1.bf16.msra.mxu0 0
        %554 = vmatprep.subr.bf16.mxu0 0
        %555 = vmatpush1.bf16.msra.mxu0 0
        %556 = vmatprep.subr.bf16.mxu0 0
        %557 = vmatpush1.bf16.msra.mxu0 0
        %558 = vmatprep.subr.bf16.mxu0 0
        %559 = vmatpush1.bf16.msra.mxu0 0
        %560 = vmatprep.subr.bf16.mxu0 0
        %561 = vmatpush1.bf16.msra.mxu0 0
        %562 = vmatprep.subr.bf16.mxu0 0
        %563 = vmatpush1.bf16.msra.mxu0 0
        %564 = vmatprep.mubr.bf16.mxu0 0
        %565 = vmatmul.mubr.bf16.gmra.mrb[0].mxu0 %v474
        %v566 = vpop.f32.mrb[0].mxu0
        %v567 = vadd.f32 %v482, %v566
        %v568 = vpop.f32.mrb[0].mxu0
        %v569 = vpop.f32.mrb[0].mxu0
        %v570 = vadd.f32 %v482, %v569
        %v571 = vpop.f32.mrb[0].mxu0
        %572 = vmatprep.mubr.bf16.mxu0 0
        %573 = vmatmul.mubr.bf16.gmra.mrb[0].mxu0 %v475
        %v574 = vpop.f32.mrb[0].mxu0
        %v575 = vadd.f32 %v482, %v574
        %v576 = vpop.f32.mrb[0].mxu0
        %v577 = vpop.f32.mrb[0].mxu0
        %v578 = vadd.f32 %v482, %v577
        %v579 = vpop.f32.mrb[0].mxu0
        %580 = vmatprep.mubr.bf16.mxu0 0
        %581 = vmatmul.mubr.bf16.gmra.mrb[0].mxu0 %v476
        %v582 = vpop.f32.mrb[0].mxu0
        %v583 = vadd.f32 %v482, %v582
        %v584 = vpop.f32.mrb[0].mxu0
        %v585 = vpop.f32.mrb[0].mxu0
        %v586 = vadd.f32 %v482, %v585
        %v587 = vpop.f32.mrb[0].mxu0
        %588 = vmatprep.mubr.bf16.mxu0 0
        %589 = vmatmul.mubr.bf16.gmra.mrb[0].mxu0 %v477
        %v590 = vpop.f32.mrb[0].mxu0
        %v591 = vadd.f32 %v482, %v590
        %v592 = vpop.f32.mrb[0].mxu0
        %v593 = vpop.f32.mrb[0].mxu0
        %v594 = vadd.f32 %v482, %v593
        %v595 = vpop.f32.mrb[0].mxu0
        %596 = vdwg.mxu0
        %v597 = vmax.f32 %v567, 0.0
        %v598 = vmax.f32 %v570, 0.0
        %v599 = vmax.f32 %v575, 0.0
        %v600 = vmax.f32 %v578, 0.0
        %v601 = vmax.f32 %v583, 0.0
        %v602 = vmax.f32 %v586, 0.0
        %v603 = vmax.f32 %v591, 0.0
        %v604 = vmax.f32 %v594, 0.0
        // Predicated region
        $region45: #{base_model_forward.1} parent=43 // pred_check
          %p605 = pneg %p298
        $region46: #{base_model_forward.1} parent=43 // pred_check_branch
          %607 = sbr.rel (%p605) target = $region48
        $region47: #{base_model_forward.1} parent=43 // pred_region
          %v608 = vpack.c.bf16 %v598, %v597
          %v609 = vpack.c.bf16 %v600, %v599
          %v610 = vpack.c.bf16 %v602, %v601
          %v611 = vpack.c.bf16 %v604, %v603
          %s612 = smul.u32 %s297, 4
          %s613 = smul.addr %s612, 8
          %s614 = scalar_lea.vmem [#allocation2], %s613
          %s615 = sshra.s32 %s272, 4
          %s616 = sand.u32 %s272, 15
          %s617 = smul.addr %s615, 8
          %s618 = scalar_lea.vmem %s614, %s617 [#allocation2]
          %619 = vst [vmem:[%s618] sm:$0xff] %v608
          %620 = vst [vmem:[%s618 + $0x8] sm:$0xff] %v609
          %621 = vst [vmem:[%s618 + $0x10] sm:$0xff] %v610
          %622 = vst [vmem:[%s618 + $0x18] sm:$0xff] %v611
        $region48: #{base_model_forward.1} parent=43 // pred_fallthru
          _
        %p623 = scmp.gt.s32.totalorder %s19, 0
        // Predicated region
        $region49: #{base_model_forward.1} parent=43 // pred_check
          %p624 = pneg %p623
        $region50: #{base_model_forward.1} parent=43 // pred_check_branch
          %626 = sbr.rel (%p624) target = $region52
        $region51: #{base_model_forward.1} parent=43 // pred_region
          %s627 = sshra.s32 %s272, 4
          %s628 = sand.u32 %s272, 15
          %s629 = smul.addr %s627, 8
          %s630 = scalar_lea.vmem %s371, %s629 [#allocation2]
          %v631 = vld [vmem:[%s630] sm:$0xff]
          %v632 = vld [vmem:[%s630 + $0x8] sm:$0xff]
          %v633 = vld [vmem:[%s630 + $0x10] sm:$0xff]
          %v634 = vld [vmem:[%s630 + $0x18] sm:$0xff]
          %v635 = vunpack.c.l.bf16 %v631
          %v636 = vunpack.c.h.bf16 %v631
          %v637 = vunpack.c.l.bf16 %v632
          %v638 = vunpack.c.h.bf16 %v632
          %v639 = vunpack.c.l.bf16 %v633
          %v640 = vunpack.c.h.bf16 %v633
          %v641 = vunpack.c.l.bf16 %v634
          %v642 = vunpack.c.h.bf16 %v634
          %v643 = vadd.f32 %v597, %v635
          %v644 = vadd.f32 %v598, %v636
          %v645 = vadd.f32 %v599, %v637
          %v646 = vadd.f32 %v600, %v638
          %v647 = vadd.f32 %v601, %v639
          %v648 = vadd.f32 %v602, %v640
          %v649 = vadd.f32 %v603, %v641
          %v650 = vadd.f32 %v604, %v642
          %v651 = vpack.c.bf16 %v644, %v643
          %v652 = vpack.c.bf16 %v646, %v645
          %v653 = vpack.c.bf16 %v648, %v647
          %v654 = vpack.c.bf16 %v650, %v649
          %s655 = smul.u32 %s297, 4
          %s656 = smul.addr %s655, 8
          %s657 = scalar_lea.vmem [#allocation2], %s656
          %s658 = smul.addr %s627, 8
          %s659 = scalar_lea.vmem %s657, %s658 [#allocation2]
          %660 = vst [vmem:[%s659] sm:$0xff] %v651
          %661 = vst [vmem:[%s659 + $0x8] sm:$0xff] %v652
          %662 = vst [vmem:[%s659 + $0x10] sm:$0xff] %v653
          %663 = vst [vmem:[%s659 + $0x18] sm:$0xff] %v654
        $region52: #{base_model_forward.1} parent=43 // pred_fallthru
          _
      $region44: #{base_model_forward.1} parent=35 // pred_fallthru
        _
      %p664 = scmp.eq.s32.totalorder %s19, 3
      // Predicated region
      $region53: #{base_model_forward.1} parent=35 // pred_check
        %p665 = pneg %p664
      $region54: #{base_model_forward.1} parent=35 // pred_check_branch
        %667 = sbr.rel (%p665) target = $region56
      $region55: #{base_model_forward.1} parent=35 // pred_region
        %s668 = smul.u32 %s284, 4
        %s669 = smul.addr %s668, 8
        %s670 = scalar_lea.vmem [#allocation2], %s669
        %s671 = sshra.s32 %s272, 4
        %s672 = sand.u32 %s272, 15
        %s673 = smul.addr %s671, 8
        %s674 = scalar_lea.vmem %s670, %s673 [#allocation2]
        %v675 = vld [vmem:[%s674] sm:$0xff]
        %v676 = vld [vmem:[%s674 + $0x8] sm:$0xff]
        %v677 = vld [vmem:[%s674 + $0x10] sm:$0xff]
        %v678 = vld [vmem:[%s674 + $0x18] sm:$0xff]
        %v680 = vlaneseq
        %v681 = vshrl.u32 %v680, 7
        %v682 = vsub.s32 0, %v681
        %v683 = vrot.slane %v356, %v682
        %v701 = vunpack.c.l.b16 %v340
        %v702 = vunpack.c.l.b16 %v341
        %v703 = vunpack.c.l.b16 %v342
        %v704 = vunpack.c.l.b16 %v343
        %v705 = vunpack.c.l.b16 %v344
        %v706 = vunpack.c.l.b16 %v345
        %v707 = vunpack.c.l.b16 %v346
        %v708 = vunpack.c.l.b16 %v347
        %v709 = vunpack.c.l.b16 %v348
        %v710 = vunpack.c.l.b16 %v349
        %v711 = vunpack.c.l.b16 %v350
        %v712 = vunpack.c.l.b16 %v351
        %v713 = vunpack.c.l.b16 %v352
        %v714 = vunpack.c.l.b16 %v353
        %v715 = vunpack.c.l.b16 %v354
        %v716 = vunpack.c.l.b16 %v355
        %v717 = vpack.c.b16 %v702, %v701
        %v718 = vpack.c.b16 %v704, %v703
        %v719 = vpack.c.b16 %v706, %v705
        %v720 = vpack.c.b16 %v708, %v707
        %v721 = vpack.c.b16 %v710, %v709
        %v722 = vpack.c.b16 %v712, %v711
        %v723 = vpack.c.b16 %v714, %v713
        %v724 = vpack.c.b16 %v716, %v715
        %733 = vmatprep.subr.bf16.mxu0 0
        %734 = vmatpush1.bf16.msra.mxu0 %v717
        %735 = vmatprep.subr.bf16.mxu0 0
        %736 = vmatpush1.bf16.msra.mxu0 %v718
        %737 = vmatprep.subr.bf16.mxu0 0
        %738 = vmatpush1.bf16.msra.mxu0 %v719
        %739 = vmatprep.subr.bf16.mxu0 0
        %740 = vmatpush1.bf16.msra.mxu0 %v720
        %741 = vmatprep.subr.bf16.mxu0 0
        %742 = vmatpush1.bf16.msra.mxu0 %v721
        %743 = vmatprep.subr.bf16.mxu0 0
        %744 = vmatpush1.bf16.msra.mxu0 %v722
        %745 = vmatprep.subr.bf16.mxu0 0
        %746 = vmatpush1.bf16.msra.mxu0 %v723
        %747 = vmatprep.subr.bf16.mxu0 0
        %748 = vmatpush1.bf16.msra.mxu0 %v724
        %749 = vmatprep.subr.bf16.mxu0 0
        %750 = vmatpush1.bf16.msra.mxu0 0
        %751 = vmatprep.subr.bf16.mxu0 0
        %752 = vmatpush1.bf16.msra.mxu0 0
        %753 = vmatprep.subr.bf16.mxu0 0
        %754 = vmatpush1.bf16.msra.mxu0 0
        %755 = vmatprep.subr.bf16.mxu0 0
        %756 = vmatpush1.bf16.msra.mxu0 0
        %757 = vmatprep.subr.bf16.mxu0 0
        %758 = vmatpush1.bf16.msra.mxu0 0
        %759 = vmatprep.subr.bf16.mxu0 0
        %760 = vmatpush1.bf16.msra.mxu0 0
        %761 = vmatprep.subr.bf16.mxu0 0
        %762 = vmatpush1.bf16.msra.mxu0 0
        %763 = vmatprep.subr.bf16.mxu0 0
        %764 = vmatpush1.bf16.msra.mxu0 0
        %765 = vmatprep.mubr.bf16.mxu0 0
        %766 = vmatmul.mubr.bf16.gmra.mrb[0].mxu0 %v675
        %v767 = vpop.f32.mrb[0].mxu0
        %v768 = vadd.f32 %v683, %v767
        %v769 = vpop.f32.mrb[0].mxu0
        %v770 = vpop.f32.mrb[0].mxu0
        %v771 = vadd.f32 %v683, %v770
        %v772 = vpop.f32.mrb[0].mxu0
        %773 = vmatprep.mubr.bf16.mxu0 0
        %774 = vmatmul.mubr.bf16.gmra.mrb[0].mxu0 %v676
        %v775 = vpop.f32.mrb[0].mxu0
        %v776 = vadd.f32 %v683, %v775
        %v777 = vpop.f32.mrb[0].mxu0
        %v778 = vpop.f32.mrb[0].mxu0
        %v779 = vadd.f32 %v683, %v778
        %v780 = vpop.f32.mrb[0].mxu0
        %781 = vmatprep.mubr.bf16.mxu0 0
        %782 = vmatmul.mubr.bf16.gmra.mrb[0].mxu0 %v677
        %v783 = vpop.f32.mrb[0].mxu0
        %v784 = vadd.f32 %v683, %v783
        %v785 = vpop.f32.mrb[0].mxu0
        %v786 = vpop.f32.mrb[0].mxu0
        %v787 = vadd.f32 %v683, %v786
        %v788 = vpop.f32.mrb[0].mxu0
        %789 = vmatprep.mubr.bf16.mxu0 0
        %790 = vmatmul.mubr.bf16.gmra.mrb[0].mxu0 %v678
        %v791 = vpop.f32.mrb[0].mxu0
        %v792 = vadd.f32 %v683, %v791
        %v793 = vpop.f32.mrb[0].mxu0
        %v794 = vpop.f32.mrb[0].mxu0
        %v795 = vadd.f32 %v683, %v794
        %v796 = vpop.f32.mrb[0].mxu0
        %797 = vdwg.mxu0
        %798 = vst [vmem:[%s267] sm:$0xff] %v768
        %799 = vst [vmem:[%s267 + $0x8] sm:$0xff] %v771
        %800 = vst [vmem:[%s267 + $0x10] sm:$0xff] %v776
        %801 = vst [vmem:[%s267 + $0x18] sm:$0xff] %v779
        %802 = vst [vmem:[%s267 + $0x20] sm:$0xff] %v784
        %803 = vst [vmem:[%s267 + $0x28] sm:$0xff] %v787
        %804 = vst [vmem:[%s267 + $0x30] sm:$0xff] %v792
        %805 = vst [vmem:[%s267 + $0x38] sm:$0xff] %v795
      $region56: #{base_model_forward.1} parent=35 // pred_fallthru
        _
      %p806 = scmp.eq.s32.totalorder %s19, 3
      %s807 = scalar_select %p806, %s20, 0
      %s808 = smul.u32 8, %s807
      %p809 = scmp.lt.s32.totalorder %s808, 7
      %s810 = scalar_select %p809, %s808, 7
      %s811 = smul.addr %s810, 8
      %s812 = scalar_lea.vmem %s4, %s811
      // Predicated region
      $region57: #{base_model_forward.1} parent=35 // pred_check
        %p813 = pneg %p152
      $region58: #{base_model_forward.1} parent=35 // pred_check_branch
        %815 = sbr.rel (%p813) target = $region60
      $region59: #{base_model_forward.1} parent=35 // pred_region
        %p816 = scmp.eq.s32.totalorder %s19, 3
        %s817 = scalar_select %p816, %s20, 0
        %s818 = smul.u32 8, %s817
      $region60: #{base_model_forward.1} parent=35 // pred_fallthru
        _
    $region36: #{base_model_forward.1} parent=5 // pred_fallthru
      _
    %p819 = scmp.le.s32.totalorder 2, %s10
    // Predicated region
    $region61: #{base_model_forward.1} parent=5 // pred_check
      %p820 = pneg %p819
    $region62: #{base_model_forward.1} parent=5 // pred_check_branch
      %822 = sbr.rel (%p820) target = $region64
    $region63: #{base_model_forward.1} parent=5 // pred_region
      %s823 = ssub.s32 %s10, 2
      // Predicated region
      $region65: #{base_model_forward.1} parent=63 // pred_check
        %p824 = pneg %p158
      $region66: #{base_model_forward.1} parent=63 // pred_check_branch
        %826 = sbr.rel (%p824) target = $region68
      $region67: #{base_model_forward.1} parent=63 // pred_region
        %p827 = scmp.eq.s32.totalorder %s21, 3
        %s828 = scalar_select %p827, %s22, 0
        %s829 = smul.u32 8, %s828
        %p830 = scmp.lt.s32.totalorder %s829, 7
        %s831 = scalar_select %p830, %s829, 7
        %s832 = smul.addr %s831, 8
        %s833 = scalar_lea.vmem %s4, %s832
      $region68: #{base_model_forward.1} parent=63 // pred_fallthru
        _
    $region64: #{base_model_forward.1} parent=5 // pred_fallthru
      _
  $region6: #{base_model_forward.1} parent=0 // loop_footer
    %s14 = sadd.s32 1, %s10
  $region7: #{base_model_forward.1} parent=0 // loop_footer_branch
    %9 = sbr.rel target = $region3
  $region8: #{base_model_forward.1} parent=0 // loop_exit
    _

</llo_original>
